<compile_context>
chip_gen: v7x
topology: tpu7x:2x2x1
jax: 0.10.0
libtpu: 0.0.40
codegen_flags: <defaults>
</compile_context>

<pallas_src>
import jax
import jax.numpy as jnp
from jax import lax
from jax.experimental import pallas as pl
from jax.experimental.pallas import tpu as pltpu


def _make_kernel(ci, th, w_pad, w_real, h_real, h_padded, neg_inv_ci):
    """Builds the kernel body with trace-time geometry baked in."""

    def kernel(idepth_ref, image_ref, sx_ref, sy_ref,
               accx_ref, accy_ref, carry_d_ref, carry_im_ref):
        t = pl.program_id(1)

        # ---- init the (1, W) column-sum accumulators per batch element ----
        @pl.when(t == 0)
        def _init():
            accx_ref[...] = jnp.zeros_like(accx_ref)
            accy_ref[...] = jnp.zeros_like(accy_ref)

        # One upcast per tile; the DMA path stays in the input dtype.
        d = idepth_ref[...].astype(jnp.float32)            # (th, w_pad)
        carry_d = carry_d_ref[...].astype(jnp.float32)     # (1, w_pad)
        carry_im = carry_im_ref[...]                       # (ci, 1, w_pad)

        # ---- image gradient channel sums (init from channel 0) ------------
        sum_ix = None          # (th,   w_pad - 1)
        sum_iy = None          # (th-1, w_pad)
        sum_ib = None          # (1,    w_pad)   boundary row (prev last row vs row 0)
        for c in range(ci):
            ic = image_ref[c].astype(jnp.float32)          # (th, w_pad)
            ax = jnp.abs(ic[:, :-1] - ic[:, 1:])
            ay = jnp.abs(ic[:-1, :] - ic[1:, :])
            ab = jnp.abs(carry_im[c].astype(jnp.float32) - ic[0:1, :])
            if c == 0:
                sum_ix, sum_iy, sum_ib = ax, ay, ab
            else:
                sum_ix = sum_ix + ax
                sum_iy = sum_iy + ay
                sum_ib = sum_ib + ab

        # exp goes to the EUP; the negate is folded into the single multiply.
        wx = jnp.exp(sum_ix * neg_inv_ci)
        wy = jnp.exp(sum_iy * neg_inv_ci)

        x_contrib = jnp.abs(d[:, :-1] - d[:, 1:]) * wx     # (th,   w_pad-1)
        y_contrib = jnp.abs(d[:-1, :] - d[1:, :]) * wy     # (th-1, w_pad)

        if h_padded:
            # Only traced when H was zero-padded: mask y pairs whose lower
            # row is a pad row (the only nonzero invalid contribution; the
            # padded depth rows/columns make every other pad term exactly 0).
            row = lax.broadcasted_iota(jnp.int32, (th - 1, 1), 0)
            y_contrib = jnp.where(t * th + row + 1 < h_real, y_contrib, 0.0)

        # ---- sublane-reduce this tile's contribution, then tiny RMW -------
        accx_ref[:, : w_pad - 1] = (
            accx_ref[:, : w_pad - 1] + jnp.sum(x_contrib, axis=0, keepdims=True))
        accy_ref[...] = accy_ref[...] + jnp.sum(y_contrib, axis=0, keepdims=True)

        # ---- exact dy across the row-tile boundary via the 1-row carry ----
        @pl.when(t != 0)
        def _boundary():
            wyb = jnp.exp(sum_ib * neg_inv_ci)                      # (1, w_pad)
            accy_ref[...] = accy_ref[...] + jnp.abs(carry_d - d[0:1, :]) * wyb

        # ---- save this tile's last rows (input dtype, vectorized stores) --
        carry_d_ref[...] = idepth_ref[th - 1:th, :]
        carry_im_ref[...] = image_ref[:, th - 1:th, :]

        # ---- one cross-lane reduction per batch element --------------------
        @pl.when(t == pl.num_programs(1) - 1)
        def _finalize():
            # Valid x pairs are columns [0, w_real - 2]; everything else
            # (the real/pad seam and the unused trailing lanes) is masked
            # exactly once here rather than per tile.
            col = lax.broadcasted_iota(jnp.int32, accx_ref.shape, 1)
            sx = jnp.sum(jnp.where(col < w_real - 1, accx_ref[...], 0.0))
            sy = jnp.sum(accy_ref[...])
            sx_ref[...] = jnp.zeros(sx_ref.shape, sx_ref.dtype) + sx
            sy_ref[...] = jnp.zeros(sy_ref.shape, sy_ref.dtype) + sy

    return kernel


def _vmem_capacity_bytes():
    """Per-core VMEM capacity; conservative fallback if the query fails."""
    try:
        cap = int(pltpu.get_tpu_info().vmem_capacity_bytes)
        if cap > 0:
            return cap
    except Exception:
        pass
    return 64 * 1024 * 1024      # v7x per-TensorCore VMEM (v5e/v6e have 128 MiB)


def _round_up(x, m):
    return -(-x // m) * m


def _pick_row_tile(h, per_row_bytes, target_block_bytes):
    """Largest multiple-of-8 row tile whose input block is near the target.

    Prefers a divisor of H (no padding); otherwise the caller zero-pads H up
    to a multiple of the returned tile.
    """
    h8 = _round_up(h, 8)
    max_rows = (target_block_bytes // max(per_row_bytes, 1)) // 8 * 8
    max_rows = max(8, min(h8, max_rows))
    if h8 <= max_rows:
        return h8                                  # single tile (H padded to 8 if ragged)
    if h % 8 == 0:
        min_ok = max(8, max_rows // 2)
        th = max_rows
        while th >= min_ok:
            if h % th == 0:
                return th                          # divisor found -> no H padding
            th -= 8
    return max_rows                                # caller pads H to a multiple of this


def inverse_depth_smoothness_loss(idepth, image, *, row_tile=None):
    if idepth.ndim != 4 or image.ndim != 4:
        raise ValueError("expected NCHW inputs")
    if idepth.shape[-2:] != image.shape[-2:]:
        raise ValueError("idepth / image spatial shapes must match")
    if idepth.shape[0] != image.shape[0]:
        raise ValueError("idepth / image batch sizes must match")
    if idepth.dtype != image.dtype:
        raise ValueError("idepth / image dtypes must match")

    n, cd, h, w = idepth.shape
    ci = image.shape[1]
    if cd != 1:
        raise ValueError("idepth must have a single channel (N, 1, H, W)")

    itemsize = jnp.dtype(idepth.dtype).itemsize

    # Lane-dense width: zero-pad W to a multiple of 128 when needed.  Padded
    # columns contribute exactly zero (depth pad is zero + finalize mask).
    w_pad = max(128, _round_up(w, 128))

    # Generation-aware VMEM budget -> large row tiles (few grid steps).
    vmem_cap = _vmem_capacity_bytes()
    budget = (vmem_cap * 3) // 4
    target_block_bytes = min(16 * 1024 * 1024, budget // 3)
    per_row_bytes = (1 + ci) * w_pad * itemsize

    if row_tile is None:
        th = _pick_row_tile(h, per_row_bytes, target_block_bytes)
    else:
        th = int(row_tile)
        if th % 8 != 0:
            raise ValueError("row_tile must be a multiple of 8")
    h_pad = _round_up(h, th)
    num_t = h_pad // th

    if (h_pad, w_pad) != (h, w):
        pad_cfg = ((0, 0), (0, 0), (0, h_pad - h), (0, w_pad - w))
        idepth_p = jnp.pad(idepth, pad_cfg)
        image_p = jnp.pad(image, pad_cfg)
    else:
        idepth_p, image_p = idepth, image

    kernel = _make_kernel(
        ci=ci, th=th, w_pad=w_pad, w_real=w, h_real=h,
        h_padded=(h_pad != h), neg_inv_ci=-1.0 / float(ci))

    # Double-buffered input blocks + tiny scratch, with explicit headroom.
    block_bytes = (1 + ci) * th * w_pad * itemsize
    scratch_bytes = 2 * 8 * w_pad * 4 + (1 + ci) * 8 * w_pad * itemsize
    vmem_limit = int(min(vmem_cap - (2 << 20),
                         max(32 << 20, 2 * block_bytes + scratch_bytes + (8 << 20))))

    sx, sy = pl.pallas_call(
        kernel,
        out_shape=(jax.ShapeDtypeStruct((n, 1, 1), jnp.float32),
                   jax.ShapeDtypeStruct((n, 1, 1), jnp.float32)),
        grid_spec=pltpu.PrefetchScalarGridSpec(
            num_scalar_prefetch=0,
            grid=(n, num_t),
            in_specs=[
                pl.BlockSpec((None, None, th, w_pad), lambda b, t: (b, 0, t, 0)),
                pl.BlockSpec((None, ci, th, w_pad), lambda b, t: (b, 0, t, 0)),
            ],
            out_specs=(
                pl.BlockSpec((None, 1, 1), lambda b, t: (b, 0, 0)),
                pl.BlockSpec((None, 1, 1), lambda b, t: (b, 0, 0)),
            ),
            scratch_shapes=[
                pltpu.VMEM((1, w_pad), jnp.float32),        # x column sums
                pltpu.VMEM((1, w_pad), jnp.float32),        # y column sums
                pltpu.VMEM((1, w_pad), idepth.dtype),       # carry: last depth row
                pltpu.VMEM((ci, 1, w_pad), idepth.dtype),   # carry: last image rows
            ],
        ),
        compiler_params=pltpu.CompilerParams(
            dimension_semantics=("parallel", "arbitrary"),
            vmem_limit_bytes=vmem_limit,
        ),
    )(idepth_p, image_p)

    count_x = max(n * cd * h * (w - 1), 1)
    count_y = max(n * cd * (h - 1) * w, 1)
    return jnp.sum(sx) * (1.0 / count_x) + jnp.sum(sy) * (1.0 / count_y)


def _reference(idepth, image):
    idepth = idepth.astype(jnp.float32)
    image = image.astype(jnp.float32)
    d_dx = idepth[:, :, :, :-1] - idepth[:, :, :, 1:]
    d_dy = idepth[:, :, :-1, :] - idepth[:, :, 1:, :]
    i_dx = image[:, :, :, :-1] - image[:, :, :, 1:]
    i_dy = image[:, :, :-1, :] - image[:, :, 1:, :]
    wx = jnp.exp(-jnp.mean(jnp.abs(i_dx), axis=1, keepdims=True))
    wy = jnp.exp(-jnp.mean(jnp.abs(i_dy), axis=1, keepdims=True))
    return jnp.mean(jnp.abs(d_dx * wx)) + jnp.mean(jnp.abs(d_dy * wy))


if __name__ == "__main__":
    key = jax.random.PRNGKey(0)
    k1, k2, k3, k4, k5, k6 = jax.random.split(key, 6)

    # Test 1: small f32 case (single row tile, W padded to the 128-lane tile).
    n, h, w = 2, 16, 16
    idepth = jax.random.uniform(k1, (n, 1, h, w), dtype=jnp.float32)
    image = jax.random.uniform(k2, (n, 3, h, w), dtype=jnp.float32)
    loss = inverse_depth_smoothness_loss(idepth, image)
    jax.block_until_ready(loss)
    ref = _reference(idepth, image)
    assert jnp.allclose(loss, ref, rtol=1e-5, atol=1e-6), (loss, ref)

    # Test 2: multi-row-tile path (boundary carry, parallel batch axis, no pad).
    h2, w2 = 32, 128
    idepth2 = jax.random.uniform(k3, (n, 1, h2, w2), dtype=jnp.float32)
    image2 = jax.random.uniform(k4, (n, 3, h2, w2), dtype=jnp.float32)
    loss2 = inverse_depth_smoothness_loss(idepth2, image2, row_tile=8)
    jax.block_until_ready(loss2)
    ref2 = _reference(idepth2, image2)
    assert jnp.allclose(loss2, ref2, rtol=1e-5, atol=1e-6), (loss2, ref2)

    # Test 3: native bf16 inputs (DMA in bf16, single upcast inside the kernel).
    idepth_bf = idepth.astype(jnp.bfloat16)
    image_bf = image.astype(jnp.bfloat16)
    loss3 = inverse_depth_smoothness_loss(idepth_bf, image_bf)
    jax.block_until_ready(loss3)
    ref3 = _reference(idepth_bf, image_bf)
    assert jnp.allclose(loss3, ref3, rtol=1e-3, atol=1e-5), (loss3, ref3)

    # Test 4: ragged shapes (H=20 -> padded rows + row mask, W=24 -> padded
    # lanes), N=1, multi-tile.
    h4, w4 = 20, 24
    idepth4 = jax.random.uniform(k5, (1, 1, h4, w4), dtype=jnp.float32)
    image4 = jax.random.uniform(k6, (1, 3, h4, w4), dtype=jnp.float32)
    loss4 = inverse_depth_smoothness_loss(idepth4, image4, row_tile=8)
    jax.block_until_ready(loss4)
    ref4 = _reference(idepth4, image4)
    assert jnp.allclose(loss4, ref4, rtol=1e-5, atol=1e-6), (loss4, ref4)

    print("KERNEL_OK")
</pallas_src>

<mosaic_0001>
module attributes {stable_mosaic.version = 11 : i64} {
  func.func @kernel(%arg0: i32, %arg1: i32, %arg2: memref<1x1x16x128xf32, #tpu.memory_space<vmem>>, %arg3: memref<1x3x16x128xf32, #tpu.memory_space<vmem>>, %arg4: memref<1x1x1xf32, #tpu.memory_space<vmem>>, %arg5: memref<1x1x1xf32, #tpu.memory_space<vmem>>, %arg6: memref<1x128xf32, #tpu.memory_space<vmem>>, %arg7: memref<1x128xf32, #tpu.memory_space<vmem>>, %arg8: memref<1x128xf32, #tpu.memory_space<vmem>>, %arg9: memref<3x1x128xf32, #tpu.memory_space<vmem>>) attributes {dimension_semantics = [#tpu.dimension_semantics<parallel>, #tpu.dimension_semantics<arbitrary>], iteration_bounds = array<i64: 2, 1>, scalar_prefetch = 0 : i64, scratch_operands = 4 : i64, tpu.core_type = #tpu.core_type<tc>, window_params = [{transform_indices = @transform_0, window_bounds = array<i64: 1, 1, 16, 128>}, {transform_indices = @transform_1, window_bounds = array<i64: 1, 3, 16, 128>}, {transform_indices = @transform_2, window_bounds = array<i64: 1, 1, 1>}, {transform_indices = @transform_3, window_bounds = array<i64: 1, 1, 1>}]} {
    %c0_i32 = arith.constant 0 : i32
    %0 = arith.cmpi eq, %arg1, %c0_i32 : i32
    %1 = arith.extui %0 : i1 to i32
    %c0_i32_0 = arith.constant 0 : i32
    %2 = arith.cmpi ne, %1, %c0_i32_0 : i32
    scf.if %2 {
      %cst_46 = arith.constant 0.000000e+00 : f32
      %96 = vector.broadcast %cst_46 : f32 to vector<1x128xf32>
      %c0_47 = arith.constant 0 : index
      %c0_48 = arith.constant 0 : index
      %97 = vector.load %arg6[%c0_47, %c0_48] : memref<1x128xf32, #tpu.memory_space<vmem>>, vector<1x128xf32>
      tpu.vector_store %arg6[%c0_47, %c0_48], %96 {strides = array<i32>} : memref<1x128xf32, #tpu.memory_space<vmem>>, vector<1x128xf32>,
      %cst_49 = arith.constant 0.000000e+00 : f32
      %98 = vector.broadcast %cst_49 : f32 to vector<1x128xf32>
      %c0_50 = arith.constant 0 : index
      %c0_51 = arith.constant 0 : index
      %99 = vector.load %arg7[%c0_50, %c0_51] : memref<1x128xf32, #tpu.memory_space<vmem>>, vector<1x128xf32>
      tpu.vector_store %arg7[%c0_50, %c0_51], %98 {strides = array<i32>} : memref<1x128xf32, #tpu.memory_space<vmem>>, vector<1x128xf32>,
    } else {
    }
    %c0 = arith.constant 0 : index
    %c0_1 = arith.constant 0 : index
    %c0_2 = arith.constant 0 : index
    %c0_3 = arith.constant 0 : index
    %3 = vector.load %arg2[%c0, %c0_1, %c0_2, %c0_3] : memref<1x1x16x128xf32, #tpu.memory_space<vmem>>, vector<1x1x16x128xf32>
    %4 = vector.shape_cast %3 : vector<1x1x16x128xf32> to vector<16x128xf32>
    %c0_4 = arith.constant 0 : index
    %c0_5 = arith.constant 0 : index
    %5 = vector.load %arg8[%c0_4, %c0_5] : memref<1x128xf32, #tpu.memory_space<vmem>>, vector<1x128xf32>
    %c0_6 = arith.constant 0 : index
    %c0_7 = arith.constant 0 : index
    %c0_8 = arith.constant 0 : index
    %6 = vector.load %arg9[%c0_6, %c0_7, %c0_8] : memref<3x1x128xf32, #tpu.memory_space<vmem>>, vector<3x1x128xf32>
    %c0_9 = arith.constant 0 : index
    %c0_10 = arith.constant 0 : index
    %c0_11 = arith.constant 0 : index
    %c0_12 = arith.constant 0 : index
    %7 = vector.load %arg3[%c0_9, %c0_10, %c0_11, %c0_12] : memref<1x3x16x128xf32, #tpu.memory_space<vmem>>, vector<1x1x16x128xf32>
    %8 = vector.shape_cast %7 : vector<1x1x16x128xf32> to vector<16x128xf32>
    %9 = vector.extract_strided_slice %8 {offsets = [0, 0], sizes = [16, 127], strides = [1, 1]} : vector<16x128xf32> to vector<16x127xf32>
    %10 = vector.extract_strided_slice %8 {offsets = [0, 1], sizes = [16, 127], strides = [1, 1]} : vector<16x128xf32> to vector<16x127xf32>
    %11 = arith.subf %9, %10 : vector<16x127xf32>
    %12 = math.absf %11 : vector<16x127xf32>
    %13 = vector.extract_strided_slice %8 {offsets = [0, 0], sizes = [15, 128], strides = [1, 1]} : vector<16x128xf32> to vector<15x128xf32>
    %14 = vector.extract_strided_slice %8 {offsets = [1, 0], sizes = [15, 128], strides = [1, 1]} : vector<16x128xf32> to vector<15x128xf32>
    %15 = arith.subf %13, %14 : vector<15x128xf32>
    %16 = math.absf %15 : vector<15x128xf32>
    %17 = vector.extract_strided_slice %6 {offsets = [0, 0, 0], sizes = [1, 1, 128], strides = [1, 1, 1]} : vector<3x1x128xf32> to vector<1x1x128xf32>
    %18 = vector.shape_cast %17 : vector<1x1x128xf32> to vector<1x128xf32>
    %19 = vector.extract_strided_slice %8 {offsets = [0, 0], sizes = [1, 128], strides = [1, 1]} : vector<16x128xf32> to vector<1x128xf32>
    %20 = arith.subf %18, %19 : vector<1x128xf32>
    %21 = math.absf %20 : vector<1x128xf32>
    %c0_13 = arith.constant 0 : index
    %c1 = arith.constant 1 : index
    %c0_14 = arith.constant 0 : index
    %c0_15 = arith.constant 0 : index
    %22 = vector.load %arg3[%c0_13, %c1, %c0_14, %c0_15] : memref<1x3x16x128xf32, #tpu.memory_space<vmem>>, vector<1x1x16x128xf32>
    %23 = vector.shape_cast %22 : vector<1x1x16x128xf32> to vector<16x128xf32>
    %24 = vector.extract_strided_slice %23 {offsets = [0, 0], sizes = [16, 127], strides = [1, 1]} : vector<16x128xf32> to vector<16x127xf32>
    %25 = vector.extract_strided_slice %23 {offsets = [0, 1], sizes = [16, 127], strides = [1, 1]} : vector<16x128xf32> to vector<16x127xf32>
    %26 = arith.subf %24, %25 : vector<16x127xf32>
    %27 = math.absf %26 : vector<16x127xf32>
    %28 = vector.extract_strided_slice %23 {offsets = [0, 0], sizes = [15, 128], strides = [1, 1]} : vector<16x128xf32> to vector<15x128xf32>
    %29 = vector.extract_strided_slice %23 {offsets = [1, 0], sizes = [15, 128], strides = [1, 1]} : vector<16x128xf32> to vector<15x128xf32>
    %30 = arith.subf %28, %29 : vector<15x128xf32>
    %31 = math.absf %30 : vector<15x128xf32>
    %32 = vector.extract_strided_slice %6 {offsets = [1, 0, 0], sizes = [1, 1, 128], strides = [1, 1, 1]} : vector<3x1x128xf32> to vector<1x1x128xf32>
    %33 = vector.shape_cast %32 : vector<1x1x128xf32> to vector<1x128xf32>
    %34 = vector.extract_strided_slice %23 {offsets = [0, 0], sizes = [1, 128], strides = [1, 1]} : vector<16x128xf32> to vector<1x128xf32>
    %35 = arith.subf %33, %34 : vector<1x128xf32>
    %36 = math.absf %35 : vector<1x128xf32>
    %37 = arith.addf %12, %27 : vector<16x127xf32>
    %38 = arith.addf %16, %31 : vector<15x128xf32>
    %39 = arith.addf %21, %36 : vector<1x128xf32>
    %c0_16 = arith.constant 0 : index
    %c2 = arith.constant 2 : index
    %c0_17 = arith.constant 0 : index
    %c0_18 = arith.constant 0 : index
    %40 = vector.load %arg3[%c0_16, %c2, %c0_17, %c0_18] : memref<1x3x16x128xf32, #tpu.memory_space<vmem>>, vector<1x1x16x128xf32>
    %41 = vector.shape_cast %40 : vector<1x1x16x128xf32> to vector<16x128xf32>
    %42 = vector.extract_strided_slice %41 {offsets = [0, 0], sizes = [16, 127], strides = [1, 1]} : vector<16x128xf32> to vector<16x127xf32>
    %43 = vector.extract_strided_slice %41 {offsets = [0, 1], sizes = [16, 127], strides = [1, 1]} : vector<16x128xf32> to vector<16x127xf32>
    %44 = arith.subf %42, %43 : vector<16x127xf32>
    %45 = math.absf %44 : vector<16x127xf32>
    %46 = vector.extract_strided_slice %41 {offsets = [0, 0], sizes = [15, 128], strides = [1, 1]} : vector<16x128xf32> to vector<15x128xf32>
    %47 = vector.extract_strided_slice %41 {offsets = [1, 0], sizes = [15, 128], strides = [1, 1]} : vector<16x128xf32> to vector<15x128xf32>
    %48 = arith.subf %46, %47 : vector<15x128xf32>
    %49 = math.absf %48 : vector<15x128xf32>
    %50 = vector.extract_strided_slice %6 {offsets = [2, 0, 0], sizes = [1, 1, 128], strides = [1, 1, 1]} : vector<3x1x128xf32> to vector<1x1x128xf32>
    %51 = vector.shape_cast %50 : vector<1x1x128xf32> to vector<1x128xf32>
    %52 = vector.extract_strided_slice %41 {offsets = [0, 0], sizes = [1, 128], strides = [1, 1]} : vector<16x128xf32> to vector<1x128xf32>
    %53 = arith.subf %51, %52 : vector<1x128xf32>
    %54 = math.absf %53 : vector<1x128xf32>
    %55 = arith.addf %37, %45 : vector<16x127xf32>
    %56 = arith.addf %38, %49 : vector<15x128xf32>
    %57 = arith.addf %39, %54 : vector<1x128xf32>
    %cst = arith.constant -0.333333343 : f32
    %58 = vector.broadcast %cst : f32 to vector<16x127xf32>
    %59 = arith.mulf %55, %58 : vector<16x127xf32>
    %60 = math.exp %59 : vector<16x127xf32>
    %cst_19 = arith.constant -0.333333343 : f32
    %61 = vector.broadcast %cst_19 : f32 to vector<15x128xf32>
    %62 = arith.mulf %56, %61 : vector<15x128xf32>
    %63 = math.exp %62 : vector<15x128xf32>
    %64 = vector.extract_strided_slice %4 {offsets = [0, 0], sizes = [16, 127], strides = [1, 1]} : vector<16x128xf32> to vector<16x127xf32>
    %65 = vector.extract_strided_slice %4 {offsets = [0, 1], sizes = [16, 127], strides = [1, 1]} : vector<16x128xf32> to vector<16x127xf32>
    %66 = arith.subf %64, %65 : vector<16x127xf32>
    %67 = math.absf %66 : vector<16x127xf32>
    %68 = arith.mulf %67, %60 : vector<16x127xf32>
    %69 = vector.extract_strided_slice %4 {offsets = [0, 0], sizes = [15, 128], strides = [1, 1]} : vector<16x128xf32> to vector<15x128xf32>
    %70 = vector.extract_strided_slice %4 {offsets = [1, 0], sizes = [15, 128], strides = [1, 1]} : vector<16x128xf32> to vector<15x128xf32>
    %71 = arith.subf %69, %70 : vector<15x128xf32>
    %72 = math.absf %71 : vector<15x128xf32>
    %73 = arith.mulf %72, %63 : vector<15x128xf32>
    %c0_20 = arith.constant 0 : index
    %c0_21 = arith.constant 0 : index
    %74 = vector.load %arg6[%c0_20, %c0_21] : memref<1x128xf32, #tpu.memory_space<vmem>>, vector<1x127xf32>
    %cst_22 = arith.constant dense<0.000000e+00> : vector<127xf32>
    %75 = vector.multi_reduction <add>, %68, %cst_22 [0] : vector<16x127xf32> to vector<127xf32>
    %76 = vector.shape_cast %75 : vector<127xf32> to vector<1x127xf32>
    %77 = arith.addf %74, %76 : vector<1x127xf32>
    %c0_23 = arith.constant 0 : index
    %c0_24 = arith.constant 0 : index
    %78 = vector.load %arg6[%c0_23, %c0_24] : memref<1x128xf32, #tpu.memory_space<vmem>>, vector<1x127xf32>
    tpu.vector_store %arg6[%c0_23, %c0_24], %77 {strides = array<i32>} : memref<1x128xf32, #tpu.memory_space<vmem>>, vector<1x127xf32>,
    %c0_25 = arith.constant 0 : index
    %c0_26 = arith.constant 0 : index
    %79 = vector.load %arg7[%c0_25, %c0_26] : memref<1x128xf32, #tpu.memory_space<vmem>>, vector<1x128xf32>
    %cst_27 = arith.constant dense<0.000000e+00> : vector<128xf32>
    %80 = vector.multi_reduction <add>, %73, %cst_27 [0] : vector<15x128xf32> to vector<128xf32>
    %81 = vector.shape_cast %80 : vector<128xf32> to vector<1x128xf32>
    %82 = arith.addf %79, %81 : vector<1x128xf32>
    %c0_28 = arith.constant 0 : index
    %c0_29 = arith.constant 0 : index
    %83 = vector.load %arg7[%c0_28, %c0_29] : memref<1x128xf32, #tpu.memory_space<vmem>>, vector<1x128xf32>
    tpu.vector_store %arg7[%c0_28, %c0_29], %82 {strides = array<i32>} : memref<1x128xf32, #tpu.memory_space<vmem>>, vector<1x128xf32>,
    %c0_i32_30 = arith.constant 0 : i32
    %84 = arith.cmpi ne, %arg1, %c0_i32_30 : i32
    %85 = arith.extui %84 : i1 to i32
    %c0_i32_31 = arith.constant 0 : i32
    %86 = arith.cmpi ne, %85, %c0_i32_31 : i32
    scf.if %86 {
      %cst_46 = arith.constant -0.333333343 : f32
      %96 = vector.broadcast %cst_46 : f32 to vector<1x128xf32>
      %97 = arith.mulf %57, %96 : vector<1x128xf32>
      %98 = math.exp %97 : vector<1x128xf32>
      %c0_47 = arith.constant 0 : index
      %c0_48 = arith.constant 0 : index
      %99 = vector.load %arg7[%c0_47, %c0_48] : memref<1x128xf32, #tpu.memory_space<vmem>>, vector<1x128xf32>
      %100 = vector.extract_strided_slice %4 {offsets = [0, 0], sizes = [1, 128], strides = [1, 1]} : vector<16x128xf32> to vector<1x128xf32>
      %101 = arith.subf %5, %100 : vector<1x128xf32>
      %102 = math.absf %101 : vector<1x128xf32>
      %103 = arith.mulf %102, %98 : vector<1x128xf32>
      %104 = arith.addf %99, %103 : vector<1x128xf32>
      %c0_49 = arith.constant 0 : index
      %c0_50 = arith.constant 0 : index
      %105 = vector.load %arg7[%c0_49, %c0_50] : memref<1x128xf32, #tpu.memory_space<vmem>>, vector<1x128xf32>
      tpu.vector_store %arg7[%c0_49, %c0_50], %104 {strides = array<i32>} : memref<1x128xf32, #tpu.memory_space<vmem>>, vector<1x128xf32>,
    } else {
    }
    %c0_32 = arith.constant 0 : index
    %c0_33 = arith.constant 0 : index
    %c15 = arith.constant 15 : index
    %c0_34 = arith.constant 0 : index
    %87 = vector.load %arg2[%c0_32, %c0_33, %c15, %c0_34] : memref<1x1x16x128xf32, #tpu.memory_space<vmem>>, vector<1x1x1x128xf32>
    %88 = vector.shape_cast %87 : vector<1x1x1x128xf32> to vector<1x128xf32>
    %c0_35 = arith.constant 0 : index
    %c0_36 = arith.constant 0 : index
    %89 = vector.load %arg8[%c0_35, %c0_36] : memref<1x128xf32, #tpu.memory_space<vmem>>, vector<1x128xf32>
    tpu.vector_store %arg8[%c0_35, %c0_36], %88 {strides = array<i32>} : memref<1x128xf32, #tpu.memory_space<vmem>>, vector<1x128xf32>,
    %c0_37 = arith.constant 0 : index
    %c0_38 = arith.constant 0 : index
    %c15_39 = arith.constant 15 : index
    %c0_40 = arith.constant 0 : index
    %90 = vector.load %arg3[%c0_37, %c0_38, %c15_39, %c0_40] : memref<1x3x16x128xf32, #tpu.memory_space<vmem>>, vector<1x3x1x128xf32>
    %91 = vector.shape_cast %90 : vector<1x3x1x128xf32> to vector<3x1x128xf32>
    %c0_41 = arith.constant 0 : index
    %c0_42 = arith.constant 0 : index
    %c0_43 = arith.constant 0 : index
    %92 = vector.load %arg9[%c0_41, %c0_42, %c0_43] : memref<3x1x128xf32, #tpu.memory_space<vmem>>, vector<3x1x128xf32>
    tpu.vector_store %arg9[%c0_41, %c0_42, %c0_43], %91 {strides = array<i32>} : memref<3x1x128xf32, #tpu.memory_space<vmem>>, vector<3x1x128xf32>,
    %c0_i32_44 = arith.constant 0 : i32
    %93 = arith.cmpi eq, %arg1, %c0_i32_44 : i32
    %94 = arith.extui %93 : i1 to i32
    %c0_i32_45 = arith.constant 0 : i32
    %95 = arith.cmpi ne, %94, %c0_i32_45 : i32
    scf.if %95 {
      %96 = tpu.iota {dimensions = array<i32: 1>} : vector<1x128xi32>
      %c15_i32 = arith.constant 15 : i32
      %97 = vector.broadcast %c15_i32 : i32 to vector<1x128xi32>
      %98 = arith.cmpi slt, %96, %97 : vector<1x128xi32>
      %c0_46 = arith.constant 0 : index
      %c0_47 = arith.constant 0 : index
      %99 = vector.load %arg6[%c0_46, %c0_47] : memref<1x128xf32, #tpu.memory_space<vmem>>, vector<1x128xf32>
      %cst_48 = arith.constant 0.000000e+00 : f32
      %100 = vector.broadcast %cst_48 : f32 to vector<1x128xf32>
      %101 = arith.select %98, %99, %100 : vector<1x128xi1>, vector<1x128xf32>
      %102 = vector.shape_cast %101 : vector<1x128xf32> to vector<1x1x128xf32>
      %cst_49 = arith.constant dense<0.000000e+00> : vector<1xf32>
      %103 = vector.multi_reduction <add>, %102, %cst_49 [1, 2] : vector<1x1x128xf32> to vector<1xf32>
      %104 = vector.shape_cast %103 : vector<1xf32> to vector<1x1x1xf32>
      %105 = vector.extract %104[0, 0, 0] : f32 from vector<1x1x1xf32>
      %c0_50 = arith.constant 0 : index
      %c0_51 = arith.constant 0 : index
      %106 = vector.load %arg7[%c0_50, %c0_51] : memref<1x128xf32, #tpu.memory_space<vmem>>, vector<1x128xf32>
      %107 = vector.shape_cast %106 : vector<1x128xf32> to vector<1x1x128xf32>
      %cst_52 = arith.constant dense<0.000000e+00> : vector<1xf32>
      %108 = vector.multi_reduction <add>, %107, %cst_52 [1, 2] : vector<1x1x128xf32> to vector<1xf32>
      %109 = vector.shape_cast %108 : vector<1xf32> to vector<1x1x1xf32>
      %110 = vector.extract %109[0, 0, 0] : f32 from vector<1x1x1xf32>
      %cst_53 = arith.constant 0.000000e+00 : f32
      %111 = vector.broadcast %cst_53 : f32 to vector<1x1xf32>
      %112 = vector.broadcast %105 : f32 to vector<1x1xf32>
      %113 = arith.addf %111, %112 : vector<1x1xf32>
      %c0_54 = arith.constant 0 : index
      %c0_55 = arith.constant 0 : index
      %c0_56 = arith.constant 0 : index
      %114 = vector.load %arg4[%c0_54, %c0_55, %c0_56] : memref<1x1x1xf32, #tpu.memory_space<vmem>>, vector<1x1x1xf32>
      %115 = vector.shape_cast %114 : vector<1x1x1xf32> to vector<1x1xf32>
      %116 = vector.shape_cast %113 : vector<1x1xf32> to vector<1x1x1xf32>
      tpu.vector_store %arg4[%c0_54, %c0_55, %c0_56], %116 {strides = array<i32>} : memref<1x1x1xf32, #tpu.memory_space<vmem>>, vector<1x1x1xf32>,
      %cst_57 = arith.constant 0.000000e+00 : f32
      %117 = vector.broadcast %cst_57 : f32 to vector<1x1xf32>
      %118 = vector.broadcast %110 : f32 to vector<1x1xf32>
      %119 = arith.addf %117, %118 : vector<1x1xf32>
      %c0_58 = arith.constant 0 : index
      %c0_59 = arith.constant 0 : index
      %c0_60 = arith.constant 0 : index
      %120 = vector.load %arg5[%c0_58, %c0_59, %c0_60] : memref<1x1x1xf32, #tpu.memory_space<vmem>>, vector<1x1x1xf32>
      %121 = vector.shape_cast %120 : vector<1x1x1xf32> to vector<1x1xf32>
      %122 = vector.shape_cast %119 : vector<1x1xf32> to vector<1x1x1xf32>
      tpu.vector_store %arg5[%c0_58, %c0_59, %c0_60], %122 {strides = array<i32>} : memref<1x1x1xf32, #tpu.memory_space<vmem>>, vector<1x1x1xf32>,
    } else {
    }
    return
  }
  func.func @transform_0(%arg0: i32, %arg1: i32) -> (i32, i32, i32, i32) {
    %c0_i32 = arith.constant 0 : i32
    %c0_i32_0 = arith.constant 0 : i32
    %c0_i32_1 = arith.constant 0 : i32
    return %arg0, %c0_i32, %arg1, %c0_i32_0 : i32, i32, i32, i32
  }
  func.func @transform_1(%arg0: i32, %arg1: i32) -> (i32, i32, i32, i32) {
    %c0_i32 = arith.constant 0 : i32
    %c0_i32_0 = arith.constant 0 : i32
    %c0_i32_1 = arith.constant 0 : i32
    return %arg0, %c0_i32, %arg1, %c0_i32_0 : i32, i32, i32, i32
  }
  func.func @transform_2(%arg0: i32, %arg1: i32) -> (i32, i32, i32) {
    %c0_i32 = arith.constant 0 : i32
    %c0_i32_0 = arith.constant 0 : i32
    %c0_i32_1 = arith.constant 0 : i32
    return %arg0, %c0_i32, %c0_i32_0 : i32, i32, i32
  }
  func.func @transform_3(%arg0: i32, %arg1: i32) -> (i32, i32, i32) {
    %c0_i32 = arith.constant 0 : i32
    %c0_i32_0 = arith.constant 0 : i32
    %c0_i32_1 = arith.constant 0 : i32
    return %arg0, %c0_i32, %c0_i32_0 : i32, i32, i32
  }
}

</mosaic_0001>

<llo_original>
// kernel: tpu_custom_call.1
$region0: #{tpu_custom_call.1}
  #allocation0 [shape = 'u32[]', space=smem, size = 0x4, offset = 0x4, fixed_abs, tag = 'smem constant byte address 0x4 - core index']
  #allocation1 [shape = 'u32[144,128]{1,0:T(1,128)}', space=vmem, size = 0x12000, scoped, tag = 'internal scratch']
  #allocation2 [shape = 'f32[1,128]{1,0:T(1,128)}', space=vmem, size = 0x200, scoped, tag = 'scratch operand']
  #allocation3 [shape = 'f32[1,128]{1,0:T(1,128)}', space=vmem, size = 0x200, scoped, tag = 'scratch operand']
  #allocation4 [shape = 'f32[1,128]{1,0:T(1,128)}', space=vmem, size = 0x200, scoped, tag = 'scratch operand']
  #allocation5 [shape = 'f32[3,1,128]{2,1,0:T(1,128)}', space=vmem, size = 0x600, scoped, tag = 'scratch operand']
  %s0 = inlined_call_operand.hbm [shape: f32[2,1,16,128], index: 0, kind: input, shape index: {}]
  %s1 = inlined_call_operand.hbm [shape: f32[2,3,16,128], index: 1, kind: input, shape index: {}]
  %s2 = inlined_call_operand.vmem [shape: f32[2,1,1], index: 2, kind: output, shape index: {0}]
  %s3 = inlined_call_operand.vmem [shape: f32[2,1,1], index: 3, kind: output, shape index: {1}]
  %4 = xla_tuple %s2, %s3
  %s5 = sld [smem:[#allocation0]]
  $region69: #{tpu_custom_call.1} parent=0
    _
  %s7 = ssub.s32 1, %s5
  %s8 = scalar_select 0, %s7, %s5
  $region1: #{tpu_custom_call.1} parent=0
    #allocation6 [shape = 'u8[16384]{0}', space=vmem, size = 0x4000, scoped, tag = 'input window, operand 0']
    #allocation7 [shape = 's32[2]{0}', space=sflag, size = 0x8, scoped, tag = 'scoped memory for tpu_custom_call.1']
    #allocation8 [shape = 'u8[49152]{0}', space=vmem, size = 0xc000, scoped, tag = 'input window, operand 1']
    #allocation9 [shape = 's32[2]{0}', space=sflag, size = 0x8, scoped, tag = 'scoped memory for tpu_custom_call.1']
    %9 = vsyncpa [#allocation7], 0
    %s10 = scalar_lea.sflag [#allocation7], 1
    %11 = vsyncpa %s10, 0
    %12 = vsyncpa [#allocation9], 0
    %s13 = scalar_lea.sflag [#allocation9], 1
    %14 = vsyncpa %s13, 0
    loop: start=0, step=1, limit=4
    $region2: #{tpu_custom_call.1} parent=1 // loop_pre_header
      _
    $region3: #{tpu_custom_call.1} parent=1 // loop_header
      %s16 = sphi 0, %s20
      %p17 = scmp.ge.s32.totalorder %s16, 4
      %s23 = sphi 0, %s35
      %s24 = sphi 0, %s31
      %s25 = sphi 0, %s23
      %s26 = sphi 0, %s24
      %s27 = sphi 0, %s25
      %s28 = sphi 0, %s26
      %s40 = sphi 0, %s42
      %s43 = sphi 0, %s40
      %s44 = sphi 0, %s43
      %s60 = sphi 0, %s44
      %s68 = sphi 0, %s70
      %s71 = sphi 0, %s68
      %s72 = sphi 0, %s71
      %s88 = sphi 0, %s72
      %s94 = sphi 0, %s96
      %s97 = sphi 0, %s94
      %s98 = sphi 0, %s97
      %s114 = sphi 0, %s98
      %s120 = sphi 0, %s122
      %s123 = sphi 0, %s120
      %s124 = sphi 0, %s123
      %s140 = sphi 0, %s124
    $region4: #{tpu_custom_call.1} parent=1 // loop_header_branch
      %19 = sbr.rel (%p17) target = $region8
    $region5: #{tpu_custom_call.1} parent=1 // loop_body
      %s21 = ssub.s32 %s16, 1
      %s22 = ssub.s32 %s16, 2
      %s29 = sadd.s32 1, %s24
      %p30 = scmp.ge.s32.totalorder %s29, 1
      %s31 = scalar_select %p30, 0, %s29
      %s32 = sadd.s32 1, %s23
      %s33 = scalar_select %p30, %s32, %s23
      %p34 = scmp.ge.s32.totalorder %s33, 2
      %s35 = scalar_select %p34, 0, %s33
      %s36 = ssub.s32 %s23, %s35
      %s37 = ssub.s32 %s24, %s31
      %s38 = sor.u32 %s36, %s37
      %p39 = scmp.eq.s32.totalorder %s38, 0
      %s41 = sadd.s32 %s40, 1
      %s42 = scalar_select %p39, %s40, %s41
      %p45 = pneg %p39
      %p46 = scmp.eq.s32.totalorder %s16, 1
      %p47 = por %p45, %p46
      %p48 = scmp.ne.s32.totalorder %s40, %s43
      %p49 = scmp.eq.s32.totalorder %s16, 0
      %p50 = por %p48, %p49
      %p51 = scmp.ne.s32.totalorder %s40, %s43
      %p52 = scmp.eq.s32.totalorder %s21, 1
      %p53 = por %p51, %p52
      %p54 = scmp.ne.s32.totalorder %s43, %s44
      %p55 = scmp.eq.s32.totalorder %s21, 0
      %p56 = por %p54, %p55
      %p57 = scmp.ne.s32.totalorder %s43, %s44
      %p58 = scmp.eq.s32.totalorder %s22, 1
      %p59 = por %p57, %p58
      %p61 = scmp.ne.s32.totalorder %s44, %s60
      %p62 = scmp.eq.s32.totalorder %s22, 0
      %p63 = por %p61, %p62
      %s64 = ssub.s32 %s23, %s35
      %s65 = ssub.s32 %s24, %s31
      %s66 = sor.u32 %s64, %s65
      %p67 = scmp.eq.s32.totalorder %s66, 0
      %s69 = sadd.s32 %s68, 1
      %s70 = scalar_select %p67, %s68, %s69
      %p73 = pneg %p67
      %p74 = scmp.eq.s32.totalorder %s16, 1
      %p75 = por %p73, %p74
      %p76 = scmp.ne.s32.totalorder %s68, %s71
      %p77 = scmp.eq.s32.totalorder %s16, 0
      %p78 = por %p76, %p77
      %p79 = scmp.ne.s32.totalorder %s68, %s71
      %p80 = scmp.eq.s32.totalorder %s21, 1
      %p81 = por %p79, %p80
      %p82 = scmp.ne.s32.totalorder %s71, %s72
      %p83 = scmp.eq.s32.totalorder %s21, 0
      %p84 = por %p82, %p83
      %p85 = scmp.ne.s32.totalorder %s71, %s72
      %p86 = scmp.eq.s32.totalorder %s22, 1
      %p87 = por %p85, %p86
      %p89 = scmp.ne.s32.totalorder %s72, %s88
      %p90 = scmp.eq.s32.totalorder %s22, 0
      %p91 = por %p89, %p90
      %s92 = ssub.s32 %s23, %s35
      %p93 = scmp.eq.s32.totalorder %s92, 0
      %s95 = sadd.s32 %s94, 1
      %s96 = scalar_select %p93, %s94, %s95
      %p99 = pneg %p93
      %p100 = scmp.eq.s32.totalorder %s16, 1
      %p101 = por %p99, %p100
      %p102 = scmp.ne.s32.totalorder %s94, %s97
      %p103 = scmp.eq.s32.totalorder %s16, 0
      %p104 = por %p102, %p103
      %p105 = scmp.ne.s32.totalorder %s94, %s97
      %p106 = scmp.eq.s32.totalorder %s21, 1
      %p107 = por %p105, %p106
      %p108 = scmp.ne.s32.totalorder %s97, %s98
      %p109 = scmp.eq.s32.totalorder %s21, 0
      %p110 = por %p108, %p109
      %p111 = scmp.ne.s32.totalorder %s97, %s98
      %p112 = scmp.eq.s32.totalorder %s22, 1
      %p113 = por %p111, %p112
      %p115 = scmp.ne.s32.totalorder %s98, %s114
      %p116 = scmp.eq.s32.totalorder %s22, 0
      %p117 = por %p115, %p116
      %s118 = ssub.s32 %s23, %s35
      %p119 = scmp.eq.s32.totalorder %s118, 0
      %s121 = sadd.s32 %s120, 1
      %s122 = scalar_select %p119, %s120, %s121
      %p125 = pneg %p119
      %p126 = scmp.eq.s32.totalorder %s16, 1
      %p127 = por %p125, %p126
      %p128 = scmp.ne.s32.totalorder %s120, %s123
      %p129 = scmp.eq.s32.totalorder %s16, 0
      %p130 = por %p128, %p129
      %p131 = scmp.ne.s32.totalorder %s120, %s123
      %p132 = scmp.eq.s32.totalorder %s21, 1
      %p133 = por %p131, %p132
      %p134 = scmp.ne.s32.totalorder %s123, %s124
      %p135 = scmp.eq.s32.totalorder %s21, 0
      %p136 = por %p134, %p135
      %p137 = scmp.ne.s32.totalorder %s123, %s124
      %p138 = scmp.eq.s32.totalorder %s22, 1
      %p139 = por %p137, %p138
      %p141 = scmp.ne.s32.totalorder %s124, %s140
      %p142 = scmp.eq.s32.totalorder %s22, 0
      %p143 = por %p141, %p142
      %p144 = scmp.le.s32.totalorder 1, %s16
      %p145 = scmp.lt.s32.totalorder %s16, 3
      %p146 = pnand %p144, %p145
      %p147 = pneg %p146
      // Predicated region
      $region9: #{tpu_custom_call.1} parent=5 // pred_check
        _
      $region10: #{tpu_custom_call.1} parent=5 // pred_check_branch
        %149 = sbr.rel (%p146) target = $region12
      $region11: #{tpu_custom_call.1} parent=5 // pred_region
        %s150 = ssub.s32 %s16, 1
      $region12: #{tpu_custom_call.1} parent=5 // pred_fallthru
        _
      %p151 = scmp.lt.s32.totalorder %s16, 2
      // Predicated region
      $region13: #{tpu_custom_call.1} parent=5 // pred_check
        %p152 = pneg %p151
      $region14: #{tpu_custom_call.1} parent=5 // pred_check_branch
        %154 = sbr.rel (%p152) target = $region16
      $region15: #{tpu_custom_call.1} parent=5 // pred_region
        // Predicated region
        $region17: #{tpu_custom_call.1} parent=15 // pred_check
          %p155 = pneg %p50
        $region18: #{tpu_custom_call.1} parent=15 // pred_check_branch
          %157 = sbr.rel (%p155) target = $region20
        $region19: #{tpu_custom_call.1} parent=15 // pred_region
          %s158 = sand.u32 %s40, 1
          %s159 = scalar_lea.sflag [#allocation7], %s158
          %s160 = sand.u32 %s40, 1
          %s161 = smul.addr %s160, 16
          %s162 = scalar_lea.vmem [#allocation6], %s161
          %s163 = smul.u32 2, %s24
          %s165 = ssub.s32 256, 256
          %166 = vsyncadd %s159, %s165
          %s167 = smul.addr %s23, 2
          %s168 = sadd.s32 %s163, %s167
          %s169 = smul.addr %s168, 128
          %s170 = scalar_lea.hbm %s0, %s169
          %s171 = sshll.u32 %s162, 4
          %s172 = int_to_ptr.vmem [resolvable:$true] %s171
          %177 = dma.hbm_to_vmem [thread:$0]  %s170, 256, %s172, %s159, 128, 128, 8
        $region20: #{tpu_custom_call.1} parent=15 // pred_fallthru
          _
        // Predicated region
        $region21: #{tpu_custom_call.1} parent=15 // pred_check
          %p178 = pneg %p78
        $region22: #{tpu_custom_call.1} parent=15 // pred_check_branch
          %180 = sbr.rel (%p178) target = $region24
        $region23: #{tpu_custom_call.1} parent=15 // pred_region
          %s181 = sand.u32 %s68, 1
          %s182 = scalar_lea.sflag [#allocation9], %s181
          %s183 = sand.u32 %s68, 1
          %s184 = smul.addr %s183, 48
          %s185 = scalar_lea.vmem [#allocation8], %s184
          %s186 = smul.u32 2, %s24
          %s188 = ssub.s32 768, 768
          %189 = vsyncadd %s182, %s188
          %s190 = smul.addr %s23, 6
          %s191 = sadd.s32 %s186, %s190
          %s192 = smul.addr %s191, 128
          %s193 = scalar_lea.hbm %s1, %s192
          %s194 = sshll.u32 %s185, 4
          %s195 = int_to_ptr.vmem [resolvable:$true] %s194
          %200 = dma.hbm_to_vmem [thread:$0]  %s193, 768, %s195, %s182, 128, 128, 8
        $region24: #{tpu_custom_call.1} parent=15 // pred_fallthru
          _
      $region16: #{tpu_custom_call.1} parent=5 // pred_fallthru
        _
      %p201 = scmp.le.s32.totalorder 1, %s16
      %p202 = scmp.lt.s32.totalorder %s16, 3
      %p203 = pnand %p201, %p202
      %p204 = pneg %p203
      // Predicated region
      $region25: #{tpu_custom_call.1} parent=5 // pred_check
        _
      $region26: #{tpu_custom_call.1} parent=5 // pred_check_branch
        %206 = sbr.rel (%p203) target = $region28
      $region27: #{tpu_custom_call.1} parent=5 // pred_region
        %s207 = ssub.s32 %s16, 1
        %s208 = sand.u32 %s43, 1
        %s209 = scalar_lea.sflag [#allocation7], %s208
        %s210 = sand.u32 %s43, 1
        %s211 = smul.addr %s210, 16
        %s212 = scalar_lea.vmem [#allocation6], %s211
        // Predicated region
        $region29: #{tpu_custom_call.1} parent=27 // pred_check
          %p213 = pneg %p56
        $region30: #{tpu_custom_call.1} parent=27 // pred_check_branch
          %215 = sbr.rel (%p213) target = $region32
        $region31: #{tpu_custom_call.1} parent=27 // pred_region
          %216 = dma.done %s209, 256
        $region32: #{tpu_custom_call.1} parent=27 // pred_fallthru
          _
        %s217 = sand.u32 %s71, 1
        %s218 = scalar_lea.sflag [#allocation9], %s217
        %s219 = sand.u32 %s71, 1
        %s220 = smul.addr %s219, 48
        %s221 = scalar_lea.vmem [#allocation8], %s220
        // Predicated region
        $region33: #{tpu_custom_call.1} parent=27 // pred_check
          %p222 = pneg %p84
        $region34: #{tpu_custom_call.1} parent=27 // pred_check_branch
          %224 = sbr.rel (%p222) target = $region36
        $region35: #{tpu_custom_call.1} parent=27 // pred_region
          %225 = dma.done %s218, 768
        $region36: #{tpu_custom_call.1} parent=27 // pred_fallthru
          _
        %s226 = sand.u32 %s43, 1
        %s227 = scalar_lea.sflag [#allocation7], %s226
        %s228 = sand.u32 %s43, 1
        %s229 = smul.addr %s228, 16
        %s230 = scalar_lea.vmem [#allocation6], %s229
        %p231 = pneg %p56
        %p232 = pneg %p53
        %s233 = sand.u32 %s71, 1
        %s234 = scalar_lea.sflag [#allocation9], %s233
        %s235 = sand.u32 %s71, 1
        %s236 = smul.addr %s235, 48
        %s237 = scalar_lea.vmem [#allocation8], %s236
        %p238 = pneg %p84
        %p239 = pneg %p81
        %p240 = pneg %p110
        %p241 = pneg %p107
        %p242 = scmp.lt.s32.totalorder %s25, 1
        %s243 = scalar_select %p242, %s25, 1
        %s244 = scalar_lea.vmem %s2, %s243
        %p245 = pneg %p136
        %p246 = pneg %p133
        %p247 = scmp.lt.s32.totalorder %s25, 1
        %s248 = scalar_select %p247, %s25, 1
        %s249 = scalar_lea.vmem %s3, %s248
        %s250 = smul.u32 2, %s26
        %s251 = smul.u32 2, %s26
        %p252 = scmp.lt.s32.totalorder %s25, 1
        %s253 = scalar_select %p252, %s25, 1
        %s254 = scalar_lea.vmem %s2, %s253
        %p255 = scmp.lt.s32.totalorder %s25, 1
        %s256 = scalar_select %p255, %s25, 1
        %s257 = scalar_lea.vmem %s3, %s256
        %p258 = scmp.eq.s32.totalorder %s26, 0
        // Predicated region
        $region37: #{tpu_custom_call.1} parent=27 // pred_check
          %p259 = pneg %p258
        $region38: #{tpu_custom_call.1} parent=27 // pred_check_branch
          %261 = sbr.rel (%p259) target = $region40
        $region39: #{tpu_custom_call.1} parent=27 // pred_region
          %262 = vst [vmem:[#allocation2] sm:$0x1] 0.0
          %263 = vst [vmem:[#allocation3] sm:$0x1] 0.0
        $region40: #{tpu_custom_call.1} parent=27 // pred_fallthru
          _
        %v264 = vld [vmem:[%s212] sm:$0xff]
        %v265 = vld [vmem:[%s212 + $0x8] sm:$0xff]
        %v266 = vld [vmem:[#allocation4] sm:$0x1]
        %v267 = vld [vmem:[#allocation5] sm:$0x1]
        %v268 = vld [vmem:[#allocation5 + $0x1] sm:$0x1]
        %v269 = vld [vmem:[#allocation5 + $0x2] sm:$0x1]
        %v270 = vld [vmem:[%s221] sm:$0xff]
        %v271 = vld [vmem:[%s221 + $0x8] sm:$0xff]
        %274 = vrot.lane.b32.xlu0 %v270, 127
        %v275 = vpop.permute.xlu0 %274
        %276 = vrot.lane.b32.xlu0 %v271, 127
        %v277 = vpop.permute.xlu0 %276
        %v280 = vsub.f32 %v270, %v275
        %v281 = vsub.f32 %v271, %v277
        %v282 = vand.u32 2147483647, %v280
        %v283 = vand.u32 2147483647, %v281
        %vm284 = vcmask 1046528
        %v285 = vrot.slane %v270, 1
        %v286 = vrot.slane %v271, 1
        %v287 = vsel %vm284, %v285, %v286
        %v290 = vsub.f32 %v270, %v287
        %v291 = vsub.f32 %v271, %v286
        %v292 = vand.u32 2147483647, %v290
        %v293 = vand.u32 2147483647, %v291
        %v294 = vsub.f32 %v267, %v270
        %v295 = vand.u32 2147483647, %v294
        %s296 = scalar_lea.vmem %s221, 16 [#allocation8]
        %v297 = vld [vmem:[%s296] sm:$0xff]
        %v298 = vld [vmem:[%s296 + $0x8] sm:$0xff]
        %301 = vrot.lane.b32.xlu0 %v297, 127
        %v302 = vpop.permute.xlu0 %301
        %303 = vrot.lane.b32.xlu0 %v298, 127
        %v304 = vpop.permute.xlu0 %303
        %v307 = vsub.f32 %v297, %v302
        %v308 = vsub.f32 %v298, %v304
        %v309 = vand.u32 2147483647, %v307
        %v310 = vand.u32 2147483647, %v308
        %v311 = vrot.slane %v297, 1
        %v312 = vrot.slane %v298, 1
        %v313 = vsel %vm284, %v311, %v312
        %v316 = vsub.f32 %v297, %v313
        %v317 = vsub.f32 %v298, %v312
        %v318 = vand.u32 2147483647, %v316
        %v319 = vand.u32 2147483647, %v317
        %v320 = vsub.f32 %v268, %v297
        %v321 = vand.u32 2147483647, %v320
        %v322 = vadd.f32 %v282, %v309
        %v323 = vadd.f32 %v283, %v310
        %v324 = vadd.f32 %v292, %v318
        %v325 = vadd.f32 %v293, %v319
        %v326 = vadd.f32 %v295, %v321
        %s327 = scalar_lea.vmem %s221, 32 [#allocation8]
        %v328 = vld [vmem:[%s327] sm:$0xff]
        %v329 = vld [vmem:[%s327 + $0x8] sm:$0xff]
        %332 = vrot.lane.b32.xlu0 %v328, 127
        %v333 = vpop.permute.xlu0 %332
        %334 = vrot.lane.b32.xlu0 %v329, 127
        %v335 = vpop.permute.xlu0 %334
        %v338 = vsub.f32 %v328, %v333
        %v339 = vsub.f32 %v329, %v335
        %v340 = vand.u32 2147483647, %v338
        %v341 = vand.u32 2147483647, %v339
        %v342 = vrot.slane %v328, 1
        %v343 = vrot.slane %v329, 1
        %v344 = vsel %vm284, %v342, %v343
        %v347 = vsub.f32 %v328, %v344
        %v348 = vsub.f32 %v329, %v343
        %v349 = vand.u32 2147483647, %v347
        %v350 = vand.u32 2147483647, %v348
        %v351 = vsub.f32 %v269, %v328
        %v352 = vand.u32 2147483647, %v351
        %v353 = vadd.f32 %v322, %v340
        %v354 = vadd.f32 %v323, %v341
        %v355 = vadd.f32 %v324, %v349
        %v356 = vadd.f32 %v325, %v350
        %v357 = vadd.f32 %v326, %v352
        %v358 = vmul.f32 %v353, -0.33333334
        %v359 = vmul.f32 %v354, -0.33333334
        %v360 = vmul.f32 %v358, 1.442695
        %v361 = vpow.pop %v360
        %v362 = vmul.f32 %v359, 1.442695
        %v363 = vpow.pop %v362
        %v364 = vmul.f32 %v355, -0.33333334
        %v365 = vmul.f32 %v356, -0.33333334
        %v366 = vmul.f32 %v364, 1.442695
        %v367 = vpow.pop %v366
        %v368 = vmul.f32 %v365, 1.442695
        %v369 = vpow.pop %v368
        %372 = vrot.lane.b32.xlu0 %v264, 127
        %v373 = vpop.permute.xlu0 %372
        %374 = vrot.lane.b32.xlu0 %v265, 127
        %v375 = vpop.permute.xlu0 %374
        %v378 = vsub.f32 %v264, %v373
        %v379 = vsub.f32 %v265, %v375
        %v380 = vand.u32 2147483647, %v378
        %v381 = vand.u32 2147483647, %v379
        %v382 = vmul.f32 %v380, %v361
        %v383 = vmul.f32 %v381, %v363
        %v384 = vrot.slane %v264, 1
        %v385 = vrot.slane %v265, 1
        %v386 = vsel %vm284, %v384, %v385
        %v389 = vsub.f32 %v264, %v386
        %v390 = vsub.f32 %v265, %v385
        %v391 = vand.u32 2147483647, %v389
        %v392 = vand.u32 2147483647, %v390
        %v393 = vmul.f32 %v391, %v367
        %v394 = vmul.f32 %v392, %v369
        %v395 = vld [vmem:[#allocation2] sm:$0x1]
        %vm396 = vcmask 1039360
        %v397 = vsel %vm396, %v382, 0.0
        %v398 = vsel %vm396, %v383, 0.0
        %v399 = vadd.f32 %v397, %v398
        %v400 = vrot.slane %v399, 4
        %v401 = vadd.f32 %v399, %v400
        %v402 = vrot.slane %v401, 2
        %v403 = vadd.f32 %v401, %v402
        %v404 = vrot.slane %v403, 1
        %v405 = vadd.f32 %v403, %v404
        %v406 = vadd.f32 %v395, %v405
        %vm407 = vcmask 1032192
        %408 = vst.msk [vmem:[#allocation2] sm:$0x1] %vm407, %v406
        %v409 = vld [vmem:[#allocation3] sm:$0x1]
        %v410 = vsel %vm284, %v394, 0.0
        %v411 = vadd.f32 %v393, %v410
        %v412 = vrot.slane %v411, 4
        %v413 = vadd.f32 %v411, %v412
        %v414 = vrot.slane %v413, 2
        %v415 = vadd.f32 %v413, %v414
        %v416 = vrot.slane %v415, 1
        %v417 = vadd.f32 %v415, %v416
        %v418 = vadd.f32 %v409, %v417
        %419 = vst [vmem:[#allocation3] sm:$0x1] %v418
        %p420 = scmp.ne.s32.totalorder %s26, 0
        // Predicated region
        $region41: #{tpu_custom_call.1} parent=27 // pred_check
          %p421 = pneg %p420
        $region42: #{tpu_custom_call.1} parent=27 // pred_check_branch
          %423 = sbr.rel (%p421) target = $region44
        $region43: #{tpu_custom_call.1} parent=27 // pred_region
          %v424 = vmul.f32 %v357, -0.33333334
          %v425 = vmul.f32 %v424, 1.442695
          %v426 = vpow.pop %v425
          %v427 = vld [vmem:[#allocation3] sm:$0x1]
          %v428 = vsub.f32 %v266, %v264
          %v429 = vand.u32 2147483647, %v428
          %v430 = vmul.f32 %v429, %v426
          %v431 = vadd.f32 %v427, %v430
          %432 = vst [vmem:[#allocation3] sm:$0x1] %v431
        $region44: #{tpu_custom_call.1} parent=27 // pred_fallthru
          _
        %v433 = vld [vmem:[%s212 + $0xf] sm:$0x1]
        %434 = vst [vmem:[#allocation4] sm:$0x1] %v433
        %v435 = vld [vmem:[%s221 + $0xf] sm:$0x1]
        %v436 = vld [vmem:[%s221 + $0x1f] sm:$0x1]
        %v437 = vld [vmem:[%s221 + $0x2f] sm:$0x1]
        %438 = vst [vmem:[#allocation5] sm:$0x1] %v435
        %439 = vst [vmem:[#allocation5 + $0x1] sm:$0x1] %v436
        %440 = vst [vmem:[#allocation5 + $0x2] sm:$0x1] %v437
        // Predicated region
        $region45: #{tpu_custom_call.1} parent=27 // pred_check
          %p441 = pneg %p258
        $region46: #{tpu_custom_call.1} parent=27 // pred_check_branch
          %443 = sbr.rel (%p441) target = $region48
        $region47: #{tpu_custom_call.1} parent=27 // pred_region
          %v444 = vlaneseq
          %v445 = vand.u32 %v444, 127
          %vm446 = vcmp.lt.s32.totalorder %v445, 15
          %v447 = vld [vmem:[#allocation2] sm:$0x1]
          %v448 = vsel %vm446, %v447, 0.0
          %vm449 = vcmask 1040384
          %v450 = vsel %vm449, %v448, 0.0
          %451 = vadd.xlane.f32.xlu0 %v450
          %v452 = vpop.xlane.xlu0 %451
          %v453 = vrot.slane %v452, 4
          %v454 = vadd.f32 %v452, %v453
          %v455 = vrot.slane %v454, 2
          %v456 = vadd.f32 %v454, %v455
          %v457 = vrot.slane %v456, 1
          %v458 = vadd.f32 %v456, %v457
          %s459 = vtos %v458
          %v460 = vld [vmem:[#allocation3] sm:$0x1]
          %v461 = vsel %vm449, %v460, 0.0
          %462 = vadd.xlane.f32.xlu0 %v461
          %v463 = vpop.xlane.xlu0 %462
          %v464 = vrot.slane %v463, 4
          %v465 = vadd.f32 %v463, %v464
          %v466 = vrot.slane %v465, 2
          %v467 = vadd.f32 %v465, %v466
          %v468 = vrot.slane %v467, 1
          %v469 = vadd.f32 %v467, %v468
          %s470 = vtos %v469
          %v471 = vstv %s459
          %v472 = vadd.f32 %v471, 0.0
          %vm473 = vcmask 0
          %474 = vst.msk [vmem:[%s254] sm:$0x1] %vm473, %v472
          %v475 = vstv %s470
          %v476 = vadd.f32 %v475, 0.0
          %477 = vst.msk [vmem:[%s257] sm:$0x1] %vm473, %v476
        $region48: #{tpu_custom_call.1} parent=27 // pred_fallthru
          _
        %p478 = scmp.lt.s32.totalorder %s25, 1
        %s479 = scalar_select %p478, %s25, 1
        %s480 = scalar_lea.vmem %s2, %s479
        %p481 = scmp.lt.s32.totalorder %s25, 1
        %s482 = scalar_select %p481, %s25, 1
        %s483 = scalar_lea.vmem %s3, %s482
        // Predicated region
        $region49: #{tpu_custom_call.1} parent=27 // pred_check
          %p484 = pneg %p107
        $region50: #{tpu_custom_call.1} parent=27 // pred_check_branch
          %486 = sbr.rel (%p484) target = $region52
        $region51: #{tpu_custom_call.1} parent=27 // pred_region
          _
        $region52: #{tpu_custom_call.1} parent=27 // pred_fallthru
          _
        // Predicated region
        $region53: #{tpu_custom_call.1} parent=27 // pred_check
          %p487 = pneg %p133
        $region54: #{tpu_custom_call.1} parent=27 // pred_check_branch
          %489 = sbr.rel (%p487) target = $region56
        $region55: #{tpu_custom_call.1} parent=27 // pred_region
          _
        $region56: #{tpu_custom_call.1} parent=27 // pred_fallthru
          _
      $region28: #{tpu_custom_call.1} parent=5 // pred_fallthru
        _
      %p490 = scmp.le.s32.totalorder 2, %s16
      // Predicated region
      $region57: #{tpu_custom_call.1} parent=5 // pred_check
        %p491 = pneg %p490
      $region58: #{tpu_custom_call.1} parent=5 // pred_check_branch
        %493 = sbr.rel (%p491) target = $region60
      $region59: #{tpu_custom_call.1} parent=5 // pred_region
        %s494 = ssub.s32 %s16, 2
        // Predicated region
        $region61: #{tpu_custom_call.1} parent=59 // pred_check
          %p495 = pneg %p113
        $region62: #{tpu_custom_call.1} parent=59 // pred_check_branch
          %497 = sbr.rel (%p495) target = $region64
        $region63: #{tpu_custom_call.1} parent=59 // pred_region
          %p498 = scmp.lt.s32.totalorder %s27, 1
          %s499 = scalar_select %p498, %s27, 1
          %s500 = scalar_lea.vmem %s2, %s499
        $region64: #{tpu_custom_call.1} parent=59 // pred_fallthru
          _
        // Predicated region
        $region65: #{tpu_custom_call.1} parent=59 // pred_check
          %p501 = pneg %p139
        $region66: #{tpu_custom_call.1} parent=59 // pred_check_branch
          %503 = sbr.rel (%p501) target = $region68
        $region67: #{tpu_custom_call.1} parent=59 // pred_region
          %p504 = scmp.lt.s32.totalorder %s27, 1
          %s505 = scalar_select %p504, %s27, 1
          %s506 = scalar_lea.vmem %s3, %s505
        $region68: #{tpu_custom_call.1} parent=59 // pred_fallthru
          _
      $region60: #{tpu_custom_call.1} parent=5 // pred_fallthru
        _
    $region6: #{tpu_custom_call.1} parent=1 // loop_footer
      %s20 = sadd.s32 1, %s16
    $region7: #{tpu_custom_call.1} parent=1 // loop_footer_branch
      %15 = sbr.rel target = $region3
    $region8: #{tpu_custom_call.1} parent=1 // loop_exit
      _
    %507 = vsyncpa [#allocation7], 1
    %s508 = scalar_lea.sflag [#allocation7], 1
    %509 = vsyncpa %s508, 1
    %510 = vsyncpa [#allocation9], 1
    %s511 = scalar_lea.sflag [#allocation9], 1
    %512 = vsyncpa %s511, 1

</llo_original>
